<compile_context>
chip_gen: v7x
topology: tpu7x:2x2x1
jax: 0.10.0
libtpu: 0.0.40
codegen_flags: <defaults>
</compile_context>

<pallas_src>
from functools import partial

import jax
import jax.numpy as jnp
from jax.experimental import pallas as pl
from jax.experimental.pallas import tpu as pltpu


# ----------------------------------------------------------------------------
# helpers
# ----------------------------------------------------------------------------
def _round_up(x, m):
    return (x + m - 1) // m * m


def _pad2d(a, rows, cols):
    r, c = a.shape
    if r == rows and c == cols:
        return a
    return jnp.pad(a, ((0, rows - r), (0, cols - c)))


def _supports_bf16_vpu():
    """bf16 elementwise is native on v6e/v7x; v5e and older lack a bf16 VPU."""
    try:
        kind = jax.devices()[0].device_kind.lower()
    except Exception:
        return True
    for tag in ("v2", "v3", "v4", "v5 lite", "v5lite", "v5e"):
        if tag in kind:
            return False
    return True


def _vmem_cap_bytes():
    """Physical per-core VMEM (64 MiB on v7x, 128 MiB on v5e/v6e)."""
    try:
        info = pltpu.get_tpu_info()
        cap = getattr(info, "vmem_capacity_bytes", None)
        if cap:
            return int(cap)
    except Exception:
        pass
    try:
        kind = jax.devices()[0].device_kind.lower()
    except Exception:
        kind = ""
    return (64 << 20) if "v7" in kind else (128 << 20)


def _const_spec(shape):
    """VMEM-resident (constant index_map) spec; single-buffered when supported."""
    index_map = lambda i: (0,) * len(shape)
    buffered = getattr(pl, "Buffered", None)
    if buffered is not None:
        try:
            return pl.BlockSpec(shape, index_map, pipeline_mode=buffered(1))
        except TypeError:
            pass
    return pl.BlockSpec(shape, index_map)


# ----------------------------------------------------------------------------
# kernel
# ----------------------------------------------------------------------------
def _fcnet_kernel(x_ref,
                  w1_ref, b1_ref,
                  w2_ref, b2_ref,
                  w3_ref, b3_ref,
                  o_ref):
    # Weights/biases arrive pre-masked, pre-padded; weights are [in, out]
    # (lane = out dim).  MXU accumulation is always f32; the elementwise
    # epilogue (bias + ReLU) runs in the bias dtype (bf16 on v6e/v7x,
    # f32 on v5e / f32 path).
    epi = b1_ref.dtype
    mxu = w2_ref.dtype

    x = x_ref[...]

    # layer 1: linear + ReLU
    h1 = jnp.dot(x, w1_ref[...], preferred_element_type=jnp.float32).astype(epi)
    h1 = jnp.maximum(h1 + b1_ref[...], 0).astype(mxu)

    # layer 2: linear + ReLU
    h2 = jnp.dot(h1, w2_ref[...], preferred_element_type=jnp.float32).astype(epi)
    h2 = jnp.maximum(h2 + b2_ref[...], 0).astype(mxu)

    # layer 3: linear (no activation)
    h3 = jnp.dot(h2, w3_ref[...], preferred_element_type=jnp.float32).astype(epi)
    h3 = h3 + b3_ref[...]

    o_ref[...] = h3.astype(o_ref.dtype)


# ----------------------------------------------------------------------------
# one-time parameter preparation (hoisted out of the hot path)
# ----------------------------------------------------------------------------
def prepare_fcnet_params(params, *, compute_dtype=jnp.bfloat16,
                         epilogue_dtype=None):
    """Fold masks, zero-pad feature dims to multiples of 128 and cast — ONCE.

    params: dict with w1,mw1,b1,mb1, w2,..., w3,...  Weights are [in, out].
    Returns a dict of padded arrays ready for fcnet_forward.
    """
    compute_dtype = jnp.dtype(compute_dtype)
    if epilogue_dtype is None:
        # bf16 epilogue only where the VPU is bf16-native (v6e/v7x).
        epilogue_dtype = (jnp.bfloat16
                          if compute_dtype == jnp.dtype(jnp.bfloat16)
                          and _supports_bf16_vpu()
                          else jnp.float32)
    epilogue_dtype = jnp.dtype(epilogue_dtype)

    in_dim, h1_dim = params["w1"].shape
    h2_dim = params["w2"].shape[1]
    out_dim = params["w3"].shape[1]

    # fold masks (matches the torch forward's w*mask, b*mask)
    w1 = params["w1"] * params["mw1"]
    b1 = params["b1"] * params["mb1"]
    w2 = params["w2"] * params["mw2"]
    b2 = params["b2"] * params["mb2"]
    w3 = params["w3"] * params["mw3"]
    b3 = params["b3"] * params["mb3"]

    kp = _round_up(in_dim, 128)
    n1p = _round_up(h1_dim, 128)
    n2p = _round_up(h2_dim, 128)
    n3p = _round_up(out_dim, 128)

    return {
        "w1": _pad2d(w1, kp, n1p).astype(compute_dtype),
        "b1": _pad2d(b1, 1, n1p).astype(epilogue_dtype),
        "w2": _pad2d(w2, n1p, n2p).astype(compute_dtype),
        "b2": _pad2d(b2, 1, n2p).astype(epilogue_dtype),
        "w3": _pad2d(w3, n2p, n3p).astype(compute_dtype),
        "b3": _pad2d(b3, 1, n3p).astype(epilogue_dtype),
        "in_dim": int(in_dim),
        "out_dim": int(out_dim),
    }


# ----------------------------------------------------------------------------
# forward
# ----------------------------------------------------------------------------
@partial(jax.jit, static_argnames=("out_dim", "block_batch"))
def _fcnet_forward_impl(x, w1, b1, w2, b2, w3, b3, *, out_dim, block_batch):
    batch, in_dim = x.shape
    kp, n1p = w1.shape
    n2p = w2.shape[1]
    n3p = w3.shape[1]

    compute_dtype = jnp.dtype(w1.dtype)
    epi_dtype = jnp.dtype(b1.dtype)
    # bf16 path stores bf16 output (halves padded writeback); f32 path stays f32.
    out_store_dtype = (jnp.dtype(jnp.bfloat16)
                       if compute_dtype == jnp.dtype(jnp.bfloat16)
                       else jnp.dtype(jnp.float32))

    # ---- batch tiling -------------------------------------------------------
    itemsize = compute_dtype.itemsize
    gran = 8 if itemsize >= 4 else (16 if itemsize == 2 else 32)
    tb = _round_up(max(1, min(block_batch, batch)), gran)
    bp = _round_up(batch, tb)
    if bp // tb < 2:
        # Split into >=2 "parallel" steps when possible so both v7x
        # TensorCores get work.
        half = _round_up(-(-bp // 2), gran)
        if half < tb:
            tb = half
            bp = _round_up(batch, tb)
    grid = (bp // tb,)

    # x.float() per the torch forward, then pad + cast to MXU dtype.
    x_p = _pad2d(x.astype(jnp.float32), bp, kp).astype(compute_dtype)

    # ---- cost estimate (advisory) ------------------------------------------
    w_bytes = (kp * n1p + n1p * n2p + n2p * n3p) * itemsize
    b_bytes = (n1p + n2p + n3p) * epi_dtype.itemsize
    flops = 2 * bp * (kp * n1p + n1p * n2p + n2p * n3p)
    bytes_accessed = (bp * kp * itemsize + w_bytes + b_bytes
                      + bp * n3p * out_store_dtype.itemsize)
    cost = pl.CostEstimate(flops=flops, transcendentals=0,
                           bytes_accessed=bytes_accessed)

    # ---- VMEM budget: double-buffered x/out tiles + single-buffered weights -
    x_tile_b = tb * kp * itemsize
    out_tile_b = tb * n3p * out_store_dtype.itemsize
    scratch_b = tb * (n1p + n2p + n3p) * 4      # f32 intermediates
    vmem_need = 2 * (x_tile_b + out_tile_b) + w_bytes + b_bytes + scratch_b
    cap = _vmem_cap_bytes()
    vmem_limit = int(min(max(int(vmem_need * 1.5), 32 << 20), (cap * 3) // 4))
    vmem_limit = int(min(max(vmem_limit, vmem_need), cap))

    out_p = pl.pallas_call(
        _fcnet_kernel,
        out_shape=jax.ShapeDtypeStruct((bp, n3p), out_store_dtype),
        grid_spec=pltpu.PrefetchScalarGridSpec(
            num_scalar_prefetch=0,
            grid=grid,
            in_specs=[
                pl.BlockSpec((tb, kp), lambda i: (i, 0)),   # x tile (pipelined)
                _const_spec((kp, n1p)),                     # w1 (resident, 1-buf)
                _const_spec((1, n1p)),                      # b1
                _const_spec((n1p, n2p)),                    # w2
                _const_spec((1, n2p)),                      # b2
                _const_spec((n2p, n3p)),                    # w3
                _const_spec((1, n3p)),                      # b3
            ],
            out_specs=pl.BlockSpec((tb, n3p), lambda i: (i, 0)),
        ),
        compiler_params=pltpu.CompilerParams(
            dimension_semantics=("parallel",),   # batch axis shards across TCs
            vmem_limit_bytes=vmem_limit,
        ),
        cost_estimate=cost,
    )(x_p, w1, b1, w2, b2, w3, b3)

    # strip batch / output-channel padding; return f32 like the torch module
    return out_p[:batch, :out_dim].astype(jnp.float32)


def fcnet_forward(x, prepped, *, block_batch=1024):
    """Forward pass using pre-prepared (mask-folded, padded, cast) params.

    block_batch: batch tile size; sweep 512-2048 for large batches.
    """
    assert x.shape[1] == prepped["in_dim"], "input feature dim mismatch"
    return _fcnet_forward_impl(
        x,
        prepped["w1"], prepped["b1"],
        prepped["w2"], prepped["b2"],
        prepped["w3"], prepped["b3"],
        out_dim=prepped["out_dim"],
        block_batch=block_batch)


# ----------------------------------------------------------------------------
# init + pure-JAX reference (matches FCNet.__init__ / FCNet.forward)
# ----------------------------------------------------------------------------
def init_fcnet_params(key, input_dim, h1_dim, h2_dim, output_dim):
    """xavier_normal_ weights (gain=1), zero biases, all-ones masks.
    Weights stored as [in, out]."""
    k1, k2, k3 = jax.random.split(key, 3)

    def xavier_normal(k, fan_in, fan_out):
        std = (2.0 / (fan_in + fan_out)) ** 0.5
        return std * jax.random.normal(k, (fan_in, fan_out), dtype=jnp.float32)

    return {
        "w1": xavier_normal(k1, input_dim, h1_dim),
        "b1": jnp.zeros((1, h1_dim), jnp.float32),
        "mw1": jnp.ones((input_dim, h1_dim), jnp.float32),
        "mb1": jnp.ones((1, h1_dim), jnp.float32),
        "w2": xavier_normal(k2, h1_dim, h2_dim),
        "b2": jnp.zeros((1, h2_dim), jnp.float32),
        "mw2": jnp.ones((h1_dim, h2_dim), jnp.float32),
        "mb2": jnp.ones((1, h2_dim), jnp.float32),
        "w3": xavier_normal(k3, h2_dim, output_dim),
        "b3": jnp.zeros((1, output_dim), jnp.float32),
        "mw3": jnp.ones((h2_dim, output_dim), jnp.float32),
        "mb3": jnp.ones((1, output_dim), jnp.float32),
    }


def fcnet_reference(x, p):
    """Pure-JAX f32 reference of the PyTorch forward."""
    x = x.astype(jnp.float32)
    h1 = jnp.maximum(x @ (p["w1"] * p["mw1"]) + (p["b1"] * p["mb1"]), 0.0)
    h2 = jnp.maximum(h1 @ (p["w2"] * p["mw2"]) + (p["b2"] * p["mb2"]), 0.0)
    return h2 @ (p["w3"] * p["mw3"]) + (p["b3"] * p["mb3"])


# TODO(synk): prune / reset_mask / random_reinit / save-load trained-weight
# bookkeeping from the PyTorch module is host-side state management on the
# unmasked params dict, not part of the forward kernel.

if __name__ == "__main__":
    input_dim, h1_dim, h2_dim, output_dim = 32, 64, 64, 8
    batch = 16

    key = jax.random.PRNGKey(0)
    kx, kparams = jax.random.split(key)
    x = jax.random.normal(kx, (batch, input_dim), dtype=jnp.float32)
    params = init_fcnet_params(kparams, input_dim, h1_dim, h2_dim, output_dim)

    ref = fcnet_reference(x, params)

    # f32 MXU path: matches the reference (both use default TPU matmul
    # precision).  Small batch splits into 2 parallel grid steps, exercising
    # the batch-tiled pipeline and megacore sharding.
    prepped_f32 = prepare_fcnet_params(params, compute_dtype=jnp.float32)
    out_f32 = jax.block_until_ready(fcnet_forward(x, prepped_f32))
    assert out_f32.shape == (batch, output_dim)
    assert jnp.allclose(out_f32, ref, atol=1e-5, rtol=1e-5), "f32 mismatch vs reference"

    # bf16 MXU path (recommended on v5e/v6e/v7x): bf16 weights/activations,
    # f32 accumulation, bf16 epilogue on bf16-VPU chips, bf16 output store.
    prepped_bf16 = prepare_fcnet_params(params, compute_dtype=jnp.bfloat16)
    out_bf16 = jax.block_until_ready(fcnet_forward(x, prepped_bf16))
    assert out_bf16.shape == (batch, output_dim)
    assert jnp.allclose(out_bf16, ref, atol=1e-1, rtol=1e-1), "bf16 mismatch vs reference"

    print("KERNEL_OK")
</pallas_src>

<mosaic_0001>
module attributes {stable_mosaic.version = 11 : i64} {
  func.func @_fcnet_kernel(%arg0: i32, %arg1: memref<8x128xf32, #tpu.memory_space<vmem>>, %arg2: memref<128x128xf32, #tpu.memory_space<vmem>>, %arg3: memref<1x128xf32, #tpu.memory_space<vmem>>, %arg4: memref<128x128xf32, #tpu.memory_space<vmem>>, %arg5: memref<1x128xf32, #tpu.memory_space<vmem>>, %arg6: memref<128x128xf32, #tpu.memory_space<vmem>>, %arg7: memref<1x128xf32, #tpu.memory_space<vmem>>, %arg8: memref<8x128xf32, #tpu.memory_space<vmem>>) attributes {dimension_semantics = [#tpu.dimension_semantics<parallel>], iteration_bounds = array<i64: 2>, scalar_prefetch = 0 : i64, scratch_operands = 0 : i64, tpu.core_type = #tpu.core_type<tc>, window_params = [{transform_indices = @transform_0, window_bounds = array<i64: 8, 128>}, {pipeline_mode = #tpu.pipeline_mode<synchronous>, transform_indices = @transform_1, window_bounds = array<i64: 128, 128>}, {pipeline_mode = #tpu.pipeline_mode<synchronous>, transform_indices = @transform_2, window_bounds = array<i64: 1, 128>}, {pipeline_mode = #tpu.pipeline_mode<synchronous>, transform_indices = @transform_3, window_bounds = array<i64: 128, 128>}, {pipeline_mode = #tpu.pipeline_mode<synchronous>, transform_indices = @transform_4, window_bounds = array<i64: 1, 128>}, {pipeline_mode = #tpu.pipeline_mode<synchronous>, transform_indices = @transform_5, window_bounds = array<i64: 128, 128>}, {pipeline_mode = #tpu.pipeline_mode<synchronous>, transform_indices = @transform_6, window_bounds = array<i64: 1, 128>}, {transform_indices = @transform_7, window_bounds = array<i64: 8, 128>}]} {
    %c0 = arith.constant 0 : index
    %c0_0 = arith.constant 0 : index
    %0 = vector.load %arg1[%c0, %c0_0] : memref<8x128xf32, #tpu.memory_space<vmem>>, vector<8x128xf32>
    %c0_1 = arith.constant 0 : index
    %c0_2 = arith.constant 0 : index
    %1 = vector.load %arg2[%c0_1, %c0_2] : memref<128x128xf32, #tpu.memory_space<vmem>>, vector<128x128xf32>
    %cst = arith.constant dense<0.000000e+00> : vector<8x128xf32>
    %2 = tpu.matmul %0, %1, %cst {dimension_numbers = #tpu.dot_dimension_numbers<[1], [0], [0], [1], [0, 0, 1, 1], [], []>} : vector<8x128xf32>, vector<128x128xf32>, vector<8x128xf32> -> vector<8x128xf32>
    %c0_3 = arith.constant 0 : index
    %c0_4 = arith.constant 0 : index
    %3 = vector.load %arg3[%c0_3, %c0_4] : memref<1x128xf32, #tpu.memory_space<vmem>>, vector<1x128xf32>
    %4 = vector.broadcast %3 : vector<1x128xf32> to vector<8x128xf32>
    %5 = arith.addf %2, %4 : vector<8x128xf32>
    %cst_5 = arith.constant 0.000000e+00 : f32
    %6 = vector.broadcast %cst_5 : f32 to vector<8x128xf32>
    %7 = arith.maximumf %5, %6 : vector<8x128xf32>
    %c0_6 = arith.constant 0 : index
    %c0_7 = arith.constant 0 : index
    %8 = vector.load %arg4[%c0_6, %c0_7] : memref<128x128xf32, #tpu.memory_space<vmem>>, vector<128x128xf32>
    %cst_8 = arith.constant dense<0.000000e+00> : vector<8x128xf32>
    %9 = tpu.matmul %7, %8, %cst_8 {dimension_numbers = #tpu.dot_dimension_numbers<[1], [0], [0], [1], [0, 0, 1, 1], [], []>} : vector<8x128xf32>, vector<128x128xf32>, vector<8x128xf32> -> vector<8x128xf32>
    %c0_9 = arith.constant 0 : index
    %c0_10 = arith.constant 0 : index
    %10 = vector.load %arg5[%c0_9, %c0_10] : memref<1x128xf32, #tpu.memory_space<vmem>>, vector<1x128xf32>
    %11 = vector.broadcast %10 : vector<1x128xf32> to vector<8x128xf32>
    %12 = arith.addf %9, %11 : vector<8x128xf32>
    %cst_11 = arith.constant 0.000000e+00 : f32
    %13 = vector.broadcast %cst_11 : f32 to vector<8x128xf32>
    %14 = arith.maximumf %12, %13 : vector<8x128xf32>
    %c0_12 = arith.constant 0 : index
    %c0_13 = arith.constant 0 : index
    %15 = vector.load %arg6[%c0_12, %c0_13] : memref<128x128xf32, #tpu.memory_space<vmem>>, vector<128x128xf32>
    %cst_14 = arith.constant dense<0.000000e+00> : vector<8x128xf32>
    %16 = tpu.matmul %14, %15, %cst_14 {dimension_numbers = #tpu.dot_dimension_numbers<[1], [0], [0], [1], [0, 0, 1, 1], [], []>} : vector<8x128xf32>, vector<128x128xf32>, vector<8x128xf32> -> vector<8x128xf32>
    %c0_15 = arith.constant 0 : index
    %c0_16 = arith.constant 0 : index
    %17 = vector.load %arg7[%c0_15, %c0_16] : memref<1x128xf32, #tpu.memory_space<vmem>>, vector<1x128xf32>
    %18 = vector.broadcast %17 : vector<1x128xf32> to vector<8x128xf32>
    %19 = arith.addf %16, %18 : vector<8x128xf32>
    %c0_17 = arith.constant 0 : index
    %c0_18 = arith.constant 0 : index
    %20 = vector.load %arg8[%c0_17, %c0_18] : memref<8x128xf32, #tpu.memory_space<vmem>>, vector<8x128xf32>
    tpu.vector_store %arg8[%c0_17, %c0_18], %19 {strides = array<i32>} : memref<8x128xf32, #tpu.memory_space<vmem>>, vector<8x128xf32>,
    return
  }
  func.func @transform_0(%arg0: i32) -> (i32, i32) {
    %c0_i32 = arith.constant 0 : i32
    %c0_i32_0 = arith.constant 0 : i32
    return %arg0, %c0_i32 : i32, i32
  }
  func.func @transform_1(%arg0: i32) -> (i32, i32) {
    %c0_i32 = arith.constant 0 : i32
    %c0_i32_0 = arith.constant 0 : i32
    %c0_i32_1 = arith.constant 0 : i32
    return %c0_i32, %c0_i32_0 : i32, i32
  }
  func.func @transform_2(%arg0: i32) -> (i32, i32) {
    %c0_i32 = arith.constant 0 : i32
    %c0_i32_0 = arith.constant 0 : i32
    %c0_i32_1 = arith.constant 0 : i32
    return %c0_i32, %c0_i32_0 : i32, i32
  }
  func.func @transform_3(%arg0: i32) -> (i32, i32) {
    %c0_i32 = arith.constant 0 : i32
    %c0_i32_0 = arith.constant 0 : i32
    %c0_i32_1 = arith.constant 0 : i32
    return %c0_i32, %c0_i32_0 : i32, i32
  }
  func.func @transform_4(%arg0: i32) -> (i32, i32) {
    %c0_i32 = arith.constant 0 : i32
    %c0_i32_0 = arith.constant 0 : i32
    %c0_i32_1 = arith.constant 0 : i32
    return %c0_i32, %c0_i32_0 : i32, i32
  }
  func.func @transform_5(%arg0: i32) -> (i32, i32) {
    %c0_i32 = arith.constant 0 : i32
    %c0_i32_0 = arith.constant 0 : i32
    %c0_i32_1 = arith.constant 0 : i32
    return %c0_i32, %c0_i32_0 : i32, i32
  }
  func.func @transform_6(%arg0: i32) -> (i32, i32) {
    %c0_i32 = arith.constant 0 : i32
    %c0_i32_0 = arith.constant 0 : i32
    %c0_i32_1 = arith.constant 0 : i32
    return %c0_i32, %c0_i32_0 : i32, i32
  }
  func.func @transform_7(%arg0: i32) -> (i32, i32) {
    %c0_i32 = arith.constant 0 : i32
    %c0_i32_0 = arith.constant 0 : i32
    return %arg0, %c0_i32 : i32, i32
  }
}

</mosaic_0001>

<llo_original>
// kernel: _fcnet_forward_impl.1
$region0: #{_fcnet_forward_impl.1}
  #allocation0 [shape = 'u32[]', space=smem, size = 0x4, offset = 0x4, fixed_abs, tag = 'smem constant byte address 0x4 - core index']
  #allocation1 [shape = 'u32[144,128]{1,0:T(1,128)}', space=vmem, size = 0x12000, scoped, tag = 'internal scratch']
  %s0 = inlined_call_operand.vmem [shape: f32[16,128], index: 0, kind: input, shape index: {}]
  %s1 = inlined_call_operand.hbm [shape: f32[128,128], index: 1, kind: input, shape index: {}]
  %s2 = inlined_call_operand.vmem [shape: f32[1,128], index: 2, kind: input, shape index: {}]
  %s3 = inlined_call_operand.hbm [shape: f32[128,128], index: 3, kind: input, shape index: {}]
  %s4 = inlined_call_operand.vmem [shape: f32[1,128], index: 4, kind: input, shape index: {}]
  %s5 = inlined_call_operand.hbm [shape: f32[128,128], index: 5, kind: input, shape index: {}]
  %s6 = inlined_call_operand.vmem [shape: f32[1,128], index: 6, kind: input, shape index: {}]
  %s7 = inlined_call_operand.vmem [shape: f32[16,128], index: 7, kind: output, shape index: {}]
  %s8 = sld [smem:[#allocation0]]
  $region73: #{_fcnet_forward_impl.1} parent=0
    _
  %s10 = ssub.s32 1, %s8
  %s11 = scalar_select 0, %s10, %s8
  $region1: #{_fcnet_forward_impl.1} parent=0
    #allocation2 [shape = 'u8[65536]{0}', space=vmem, size = 0x10000, scoped, tag = 'input window, operand 1, single buffered']
    #allocation3 [shape = 's32[2]{0}', space=sflag, size = 0x8, scoped, tag = 'scoped memory for _fcnet_forward_impl.1']
    #allocation4 [shape = 'u8[65536]{0}', space=vmem, size = 0x10000, scoped, tag = 'input window, operand 3, single buffered']
    #allocation5 [shape = 's32[1]{0}', space=sflag, size = 0x4, scoped, tag = 'scoped memory for _fcnet_forward_impl.1']
    #allocation6 [shape = 'u8[65536]{0}', space=vmem, size = 0x10000, scoped, tag = 'input window, operand 5, single buffered']
    %12 = vsyncpa [#allocation3], 0
    %13 = vsyncpa [#allocation5], 0
    loop: start=0, step=1, limit=4
    $region2: #{_fcnet_forward_impl.1} parent=1 // loop_pre_header
      _
    $region3: #{_fcnet_forward_impl.1} parent=1 // loop_header
      %s15 = sphi 0, %s19
      %p16 = scmp.ge.s32.totalorder %s15, 4
      %s25 = sphi 0, %s27
      %s28 = sphi 0, %s25
      %s29 = sphi 0, %s28
      %s45 = sphi 0, %s29
      %s49 = sphi 0, %s49
      %s51 = sphi 0, %s49
      %s52 = sphi 0, %s51
      %s66 = sphi 0, %s52
      %s70 = sphi 0, %s70
      %s72 = sphi 0, %s70
      %s73 = sphi 0, %s72
      %s87 = sphi 0, %s73
      %s91 = sphi 0, %s91
      %s93 = sphi 0, %s91
      %s94 = sphi 0, %s93
      %s108 = sphi 0, %s94
      %s112 = sphi 0, %s112
      %s114 = sphi 0, %s112
      %s115 = sphi 0, %s114
      %s129 = sphi 0, %s115
      %s133 = sphi 0, %s133
      %s135 = sphi 0, %s133
      %s136 = sphi 0, %s135
      %s150 = sphi 0, %s136
      %s154 = sphi 0, %s154
      %s156 = sphi 0, %s154
      %s157 = sphi 0, %s156
      %s171 = sphi 0, %s157
      %s177 = sphi 0, %s179
      %s180 = sphi 0, %s177
      %s181 = sphi 0, %s180
      %s197 = sphi 0, %s181
    $region4: #{_fcnet_forward_impl.1} parent=1 // loop_header_branch
      %18 = sbr.rel (%p16) target = $region8
    $region5: #{_fcnet_forward_impl.1} parent=1 // loop_body
      %s20 = ssub.s32 %s15, 1
      %s21 = ssub.s32 %s15, 2
      %s22 = sadd.s32 %s15, 1
      %s23 = ssub.s32 %s15, %s22
      %p24 = scmp.eq.s32.totalorder %s23, 0
      %s26 = sadd.s32 %s25, 1
      %s27 = scalar_select %p24, %s25, %s26
      %p30 = pneg %p24
      %p31 = scmp.eq.s32.totalorder %s15, 1
      %p32 = por %p30, %p31
      %p33 = scmp.ne.s32.totalorder %s25, %s28
      %p34 = scmp.eq.s32.totalorder %s15, 0
      %p35 = por %p33, %p34
      %p36 = scmp.ne.s32.totalorder %s25, %s28
      %p37 = scmp.eq.s32.totalorder %s20, 1
      %p38 = por %p36, %p37
      %p39 = scmp.ne.s32.totalorder %s28, %s29
      %p40 = scmp.eq.s32.totalorder %s20, 0
      %p41 = por %p39, %p40
      %p42 = scmp.ne.s32.totalorder %s28, %s29
      %p43 = scmp.eq.s32.totalorder %s21, 1
      %p44 = por %p42, %p43
      %p46 = scmp.ne.s32.totalorder %s29, %s45
      %p47 = scmp.eq.s32.totalorder %s21, 0
      %p48 = por %p46, %p47
      %s50 = sadd.s32 %s49, 1
      %p53 = scmp.eq.s32.totalorder %s15, 1
      %p54 = scmp.ne.s32.totalorder %s49, %s51
      %p55 = scmp.eq.s32.totalorder %s15, 0
      %p56 = por %p54, %p55
      %p57 = scmp.ne.s32.totalorder %s49, %s51
      %p58 = scmp.eq.s32.totalorder %s20, 1
      %p59 = por %p57, %p58
      %p60 = scmp.ne.s32.totalorder %s51, %s52
      %p61 = scmp.eq.s32.totalorder %s20, 0
      %p62 = por %p60, %p61
      %p63 = scmp.ne.s32.totalorder %s51, %s52
      %p64 = scmp.eq.s32.totalorder %s21, 1
      %p65 = por %p63, %p64
      %p67 = scmp.ne.s32.totalorder %s52, %s66
      %p68 = scmp.eq.s32.totalorder %s21, 0
      %p69 = por %p67, %p68
      %s71 = sadd.s32 %s70, 1
      %p74 = scmp.eq.s32.totalorder %s15, 1
      %p75 = scmp.ne.s32.totalorder %s70, %s72
      %p76 = scmp.eq.s32.totalorder %s15, 0
      %p77 = por %p75, %p76
      %p78 = scmp.ne.s32.totalorder %s70, %s72
      %p79 = scmp.eq.s32.totalorder %s20, 1
      %p80 = por %p78, %p79
      %p81 = scmp.ne.s32.totalorder %s72, %s73
      %p82 = scmp.eq.s32.totalorder %s20, 0
      %p83 = por %p81, %p82
      %p84 = scmp.ne.s32.totalorder %s72, %s73
      %p85 = scmp.eq.s32.totalorder %s21, 1
      %p86 = por %p84, %p85
      %p88 = scmp.ne.s32.totalorder %s73, %s87
      %p89 = scmp.eq.s32.totalorder %s21, 0
      %p90 = por %p88, %p89
      %s92 = sadd.s32 %s91, 1
      %p95 = scmp.eq.s32.totalorder %s15, 1
      %p96 = scmp.ne.s32.totalorder %s91, %s93
      %p97 = scmp.eq.s32.totalorder %s15, 0
      %p98 = por %p96, %p97
      %p99 = scmp.ne.s32.totalorder %s91, %s93
      %p100 = scmp.eq.s32.totalorder %s20, 1
      %p101 = por %p99, %p100
      %p102 = scmp.ne.s32.totalorder %s93, %s94
      %p103 = scmp.eq.s32.totalorder %s20, 0
      %p104 = por %p102, %p103
      %p105 = scmp.ne.s32.totalorder %s93, %s94
      %p106 = scmp.eq.s32.totalorder %s21, 1
      %p107 = por %p105, %p106
      %p109 = scmp.ne.s32.totalorder %s94, %s108
      %p110 = scmp.eq.s32.totalorder %s21, 0
      %p111 = por %p109, %p110
      %s113 = sadd.s32 %s112, 1
      %p116 = scmp.eq.s32.totalorder %s15, 1
      %p117 = scmp.ne.s32.totalorder %s112, %s114
      %p118 = scmp.eq.s32.totalorder %s15, 0
      %p119 = por %p117, %p118
      %p120 = scmp.ne.s32.totalorder %s112, %s114
      %p121 = scmp.eq.s32.totalorder %s20, 1
      %p122 = por %p120, %p121
      %p123 = scmp.ne.s32.totalorder %s114, %s115
      %p124 = scmp.eq.s32.totalorder %s20, 0
      %p125 = por %p123, %p124
      %p126 = scmp.ne.s32.totalorder %s114, %s115
      %p127 = scmp.eq.s32.totalorder %s21, 1
      %p128 = por %p126, %p127
      %p130 = scmp.ne.s32.totalorder %s115, %s129
      %p131 = scmp.eq.s32.totalorder %s21, 0
      %p132 = por %p130, %p131
      %s134 = sadd.s32 %s133, 1
      %p137 = scmp.eq.s32.totalorder %s15, 1
      %p138 = scmp.ne.s32.totalorder %s133, %s135
      %p139 = scmp.eq.s32.totalorder %s15, 0
      %p140 = por %p138, %p139
      %p141 = scmp.ne.s32.totalorder %s133, %s135
      %p142 = scmp.eq.s32.totalorder %s20, 1
      %p143 = por %p141, %p142
      %p144 = scmp.ne.s32.totalorder %s135, %s136
      %p145 = scmp.eq.s32.totalorder %s20, 0
      %p146 = por %p144, %p145
      %p147 = scmp.ne.s32.totalorder %s135, %s136
      %p148 = scmp.eq.s32.totalorder %s21, 1
      %p149 = por %p147, %p148
      %p151 = scmp.ne.s32.totalorder %s136, %s150
      %p152 = scmp.eq.s32.totalorder %s21, 0
      %p153 = por %p151, %p152
      %s155 = sadd.s32 %s154, 1
      %p158 = scmp.eq.s32.totalorder %s15, 1
      %p159 = scmp.ne.s32.totalorder %s154, %s156
      %p160 = scmp.eq.s32.totalorder %s15, 0
      %p161 = por %p159, %p160
      %p162 = scmp.ne.s32.totalorder %s154, %s156
      %p163 = scmp.eq.s32.totalorder %s20, 1
      %p164 = por %p162, %p163
      %p165 = scmp.ne.s32.totalorder %s156, %s157
      %p166 = scmp.eq.s32.totalorder %s20, 0
      %p167 = por %p165, %p166
      %p168 = scmp.ne.s32.totalorder %s156, %s157
      %p169 = scmp.eq.s32.totalorder %s21, 1
      %p170 = por %p168, %p169
      %p172 = scmp.ne.s32.totalorder %s157, %s171
      %p173 = scmp.eq.s32.totalorder %s21, 0
      %p174 = por %p172, %p173
      %s175 = ssub.s32 %s15, %s22
      %p176 = scmp.eq.s32.totalorder %s175, 0
      %s178 = sadd.s32 %s177, 1
      %s179 = scalar_select %p176, %s177, %s178
      %p182 = pneg %p176
      %p183 = scmp.eq.s32.totalorder %s15, 1
      %p184 = por %p182, %p183
      %p185 = scmp.ne.s32.totalorder %s177, %s180
      %p186 = scmp.eq.s32.totalorder %s15, 0
      %p187 = por %p185, %p186
      %p188 = scmp.ne.s32.totalorder %s177, %s180
      %p189 = scmp.eq.s32.totalorder %s20, 1
      %p190 = por %p188, %p189
      %p191 = scmp.ne.s32.totalorder %s180, %s181
      %p192 = scmp.eq.s32.totalorder %s20, 0
      %p193 = por %p191, %p192
      %p194 = scmp.ne.s32.totalorder %s180, %s181
      %p195 = scmp.eq.s32.totalorder %s21, 1
      %p196 = por %p194, %p195
      %p198 = scmp.ne.s32.totalorder %s181, %s197
      %p199 = scmp.eq.s32.totalorder %s21, 0
      %p200 = por %p198, %p199
      %p201 = scmp.le.s32.totalorder 1, %s15
      %p202 = scmp.lt.s32.totalorder %s15, 3
      %p203 = pnand %p201, %p202
      %p204 = pneg %p203
      // Predicated region
      $region9: #{_fcnet_forward_impl.1} parent=5 // pred_check
        _
      $region10: #{_fcnet_forward_impl.1} parent=5 // pred_check_branch
        %206 = sbr.rel (%p203) target = $region12
      $region11: #{_fcnet_forward_impl.1} parent=5 // pred_region
        %s207 = ssub.s32 %s15, 1
        // Predicated region
        $region13: #{_fcnet_forward_impl.1} parent=11 // pred_check
          %p208 = pneg %p62
        $region14: #{_fcnet_forward_impl.1} parent=11 // pred_check_branch
          %210 = sbr.rel (%p208) target = $region16
        $region15: #{_fcnet_forward_impl.1} parent=11 // pred_region
          %s212 = ssub.s32 2048, 2048
          %213 = vsyncadd [#allocation3], %s212
          %s214 = sshll.u32 [#allocation2], 4
          %s215 = int_to_ptr.vmem [resolvable:$true] %s214
          %220 = dma.hbm_to_vmem [thread:$0]  %s1, 2048, %s215, [#allocation3], 128, 128, 8
        $region16: #{_fcnet_forward_impl.1} parent=11 // pred_fallthru
          _
        // Predicated region
        $region17: #{_fcnet_forward_impl.1} parent=11 // pred_check
          %p221 = pneg %p83
        $region18: #{_fcnet_forward_impl.1} parent=11 // pred_check_branch
          %223 = sbr.rel (%p221) target = $region20
        $region19: #{_fcnet_forward_impl.1} parent=11 // pred_region
          _
        $region20: #{_fcnet_forward_impl.1} parent=11 // pred_fallthru
          _
        // Predicated region
        $region21: #{_fcnet_forward_impl.1} parent=11 // pred_check
          %p224 = pneg %p104
        $region22: #{_fcnet_forward_impl.1} parent=11 // pred_check_branch
          %226 = sbr.rel (%p224) target = $region24
        $region23: #{_fcnet_forward_impl.1} parent=11 // pred_region
          %s228 = ssub.s32 2048, 2048
          %229 = vsyncadd [#allocation5], %s228
          %s230 = sshll.u32 [#allocation4], 4
          %s231 = int_to_ptr.vmem [resolvable:$true] %s230
          %236 = dma.hbm_to_vmem [thread:$0]  %s3, 2048, %s231, [#allocation5], 128, 128, 8
        $region24: #{_fcnet_forward_impl.1} parent=11 // pred_fallthru
          _
        // Predicated region
        $region25: #{_fcnet_forward_impl.1} parent=11 // pred_check
          %p237 = pneg %p125
        $region26: #{_fcnet_forward_impl.1} parent=11 // pred_check_branch
          %239 = sbr.rel (%p237) target = $region28
        $region27: #{_fcnet_forward_impl.1} parent=11 // pred_region
          _
        $region28: #{_fcnet_forward_impl.1} parent=11 // pred_fallthru
          _
        // Predicated region
        $region29: #{_fcnet_forward_impl.1} parent=11 // pred_check
          %p240 = pneg %p146
        $region30: #{_fcnet_forward_impl.1} parent=11 // pred_check_branch
          %242 = sbr.rel (%p240) target = $region32
        $region31: #{_fcnet_forward_impl.1} parent=11 // pred_region
          %s244 = ssub.s32 2048, 2048
          %245 = vsyncadd [#allocation5], %s244
          %s246 = sshll.u32 [#allocation6], 4
          %s247 = int_to_ptr.vmem [resolvable:$true] %s246
          %252 = dma.hbm_to_vmem [thread:$0]  %s5, 2048, %s247, [#allocation5], 128, 128, 8
        $region32: #{_fcnet_forward_impl.1} parent=11 // pred_fallthru
          _
        // Predicated region
        $region33: #{_fcnet_forward_impl.1} parent=11 // pred_check
          %p253 = pneg %p167
        $region34: #{_fcnet_forward_impl.1} parent=11 // pred_check_branch
          %255 = sbr.rel (%p253) target = $region36
        $region35: #{_fcnet_forward_impl.1} parent=11 // pred_region
          _
        $region36: #{_fcnet_forward_impl.1} parent=11 // pred_fallthru
          _
      $region12: #{_fcnet_forward_impl.1} parent=5 // pred_fallthru
        _
      %p256 = scmp.lt.s32.totalorder %s15, 2
      // Predicated region
      $region37: #{_fcnet_forward_impl.1} parent=5 // pred_check
        %p257 = pneg %p256
      $region38: #{_fcnet_forward_impl.1} parent=5 // pred_check_branch
        %259 = sbr.rel (%p257) target = $region40
      $region39: #{_fcnet_forward_impl.1} parent=5 // pred_region
        // Predicated region
        $region41: #{_fcnet_forward_impl.1} parent=39 // pred_check
          %p260 = pneg %p35
        $region42: #{_fcnet_forward_impl.1} parent=39 // pred_check_branch
          %262 = sbr.rel (%p260) target = $region44
        $region43: #{_fcnet_forward_impl.1} parent=39 // pred_region
          %p263 = scmp.lt.s32.totalorder %s15, 1
          %s264 = scalar_select %p263, %s15, 1
          %s265 = smul.addr %s264, 8
          %s266 = scalar_lea.vmem %s0, %s265
        $region44: #{_fcnet_forward_impl.1} parent=39 // pred_fallthru
          _
      $region40: #{_fcnet_forward_impl.1} parent=5 // pred_fallthru
        _
      %p267 = scmp.le.s32.totalorder 1, %s15
      %p268 = scmp.lt.s32.totalorder %s15, 3
      %p269 = pnand %p267, %p268
      %p270 = pneg %p269
      // Predicated region
      $region45: #{_fcnet_forward_impl.1} parent=5 // pred_check
        _
      $region46: #{_fcnet_forward_impl.1} parent=5 // pred_check_branch
        %272 = sbr.rel (%p269) target = $region48
      $region47: #{_fcnet_forward_impl.1} parent=5 // pred_region
        %s273 = ssub.s32 %s15, 1
        // Predicated region
        $region49: #{_fcnet_forward_impl.1} parent=47 // pred_check
          %p274 = pneg %p62
        $region50: #{_fcnet_forward_impl.1} parent=47 // pred_check_branch
          %276 = sbr.rel (%p274) target = $region52
        $region51: #{_fcnet_forward_impl.1} parent=47 // pred_region
          %277 = dma.done [#allocation3], 2048
        $region52: #{_fcnet_forward_impl.1} parent=47 // pred_fallthru
          _
        // Predicated region
        $region53: #{_fcnet_forward_impl.1} parent=47 // pred_check
          %p278 = pneg %p104
        $region54: #{_fcnet_forward_impl.1} parent=47 // pred_check_branch
          %280 = sbr.rel (%p278) target = $region56
        $region55: #{_fcnet_forward_impl.1} parent=47 // pred_region
          %281 = dma.done [#allocation5], 2048
        $region56: #{_fcnet_forward_impl.1} parent=47 // pred_fallthru
          _
        // Predicated region
        $region57: #{_fcnet_forward_impl.1} parent=47 // pred_check
          %p282 = pneg %p146
        $region58: #{_fcnet_forward_impl.1} parent=47 // pred_check_branch
          %284 = sbr.rel (%p282) target = $region60
        $region59: #{_fcnet_forward_impl.1} parent=47 // pred_region
          %285 = dma.done [#allocation5], 2048
        $region60: #{_fcnet_forward_impl.1} parent=47 // pred_fallthru
          _
        %p286 = scmp.lt.s32.totalorder %s20, 1
        %s287 = scalar_select %p286, %s20, 1
        %s288 = smul.addr %s287, 8
        %s289 = scalar_lea.vmem %s0, %s288
        %p290 = pneg %p41
        %p291 = pneg %p38
        %p292 = pneg %p62
        %p293 = pneg %p59
        %p294 = pneg %p83
        %p295 = pneg %p80
        %p296 = pneg %p104
        %p297 = pneg %p101
        %p298 = pneg %p125
        %p299 = pneg %p122
        %p300 = pneg %p146
        %p301 = pneg %p143
        %p302 = pneg %p167
        %p303 = pneg %p164
        %p304 = pneg %p193
        %p305 = pneg %p190
        %p306 = scmp.lt.s32.totalorder %s20, 1
        %s307 = scalar_select %p306, %s20, 1
        %s308 = smul.addr %s307, 8
        %s309 = scalar_lea.vmem %s7, %s308
        %p310 = scmp.lt.s32.totalorder %s20, 1
        %s311 = scalar_select %p310, %s20, 1
        %s312 = smul.addr %s311, 8
        %s313 = scalar_lea.vmem %s0, %s312
        %p314 = scmp.lt.s32.totalorder %s20, 1
        %s315 = scalar_select %p314, %s20, 1
        %s316 = smul.addr %s315, 8
        %s317 = scalar_lea.vmem %s7, %s316
        %v318 = vld [vmem:[%s313] sm:$0xff]
        %v319 = vld [vmem:[#allocation2] sm:$0xff]
        %v320 = vld [vmem:[#allocation2 + $0x8] sm:$0xff]
        %v321 = vld [vmem:[#allocation2 + $0x10] sm:$0xff]
        %v322 = vld [vmem:[#allocation2 + $0x18] sm:$0xff]
        %v323 = vld [vmem:[#allocation2 + $0x20] sm:$0xff]
        %v324 = vld [vmem:[#allocation2 + $0x28] sm:$0xff]
        %v325 = vld [vmem:[#allocation2 + $0x30] sm:$0xff]
        %v326 = vld [vmem:[#allocation2 + $0x38] sm:$0xff]
        %v327 = vld [vmem:[#allocation2 + $0x40] sm:$0xff]
        %v328 = vld [vmem:[#allocation2 + $0x48] sm:$0xff]
        %v329 = vld [vmem:[#allocation2 + $0x50] sm:$0xff]
        %v330 = vld [vmem:[#allocation2 + $0x58] sm:$0xff]
        %v331 = vld [vmem:[#allocation2 + $0x60] sm:$0xff]
        %v332 = vld [vmem:[#allocation2 + $0x68] sm:$0xff]
        %v333 = vld [vmem:[#allocation2 + $0x70] sm:$0xff]
        %v334 = vld [vmem:[#allocation2 + $0x78] sm:$0xff]
        %v335 = vld [vmem:[%s2] sm:$0x1]
        %v337 = vlaneseq
        %v338 = vshrl.u32 %v337, 7
        %v339 = vsub.s32 0, %v338
        %v340 = vrot.slane %v335, %v339
        %342 = vmatprep.subr.mxu0 0.0
        %343 = vmatpush1.msra.mxu0 %v319
        %344 = vmatprep.subr.mxu0 0.0
        %345 = vmatpush1.msra.mxu0 %v320
        %346 = vmatprep.subr.mxu0 0.0
        %347 = vmatpush1.msra.mxu0 %v321
        %348 = vmatprep.subr.mxu0 0.0
        %349 = vmatpush1.msra.mxu0 %v322
        %350 = vmatprep.subr.mxu0 0.0
        %351 = vmatpush1.msra.mxu0 %v323
        %352 = vmatprep.subr.mxu0 0.0
        %353 = vmatpush1.msra.mxu0 %v324
        %354 = vmatprep.subr.mxu0 0.0
        %355 = vmatpush1.msra.mxu0 %v325
        %356 = vmatprep.subr.mxu0 0.0
        %357 = vmatpush1.msra.mxu0 %v326
        %358 = vmatprep.subr.mxu0 0.0
        %359 = vmatpush1.msra.mxu0 %v327
        %360 = vmatprep.subr.mxu0 0.0
        %361 = vmatpush1.msra.mxu0 %v328
        %362 = vmatprep.subr.mxu0 0.0
        %363 = vmatpush1.msra.mxu0 %v329
        %364 = vmatprep.subr.mxu0 0.0
        %365 = vmatpush1.msra.mxu0 %v330
        %366 = vmatprep.subr.mxu0 0.0
        %367 = vmatpush1.msra.mxu0 %v331
        %368 = vmatprep.subr.mxu0 0.0
        %369 = vmatpush1.msra.mxu0 %v332
        %370 = vmatprep.subr.mxu0 0.0
        %371 = vmatpush1.msra.mxu0 %v333
        %372 = vmatprep.subr.mxu0 0.0
        %373 = vmatpush1.msra.mxu0 %v334
        %374 = vmatprep.subr.mxu0 0.0
        %375 = vmatpush1.msra.mxu0 0.0
        %376 = vmatprep.subr.mxu0 0.0
        %377 = vmatpush1.msra.mxu0 0.0
        %378 = vmatprep.subr.mxu0 0.0
        %379 = vmatpush1.msra.mxu0 0.0
        %380 = vmatprep.subr.mxu0 0.0
        %381 = vmatpush1.msra.mxu0 0.0
        %382 = vmatprep.subr.mxu0 0.0
        %383 = vmatpush1.msra.mxu0 0.0
        %384 = vmatprep.subr.mxu0 0.0
        %385 = vmatpush1.msra.mxu0 0.0
        %386 = vmatprep.subr.mxu0 0.0
        %387 = vmatpush1.msra.mxu0 0.0
        %388 = vmatprep.subr.mxu0 0.0
        %389 = vmatpush1.msra.mxu0 0.0
        %390 = vmatprep.subr.mxu0 0.0
        %391 = vmatpush1.msra.mxu0 0.0
        %392 = vmatprep.subr.mxu0 0.0
        %393 = vmatpush1.msra.mxu0 0.0
        %394 = vmatprep.subr.mxu0 0.0
        %395 = vmatpush1.msra.mxu0 0.0
        %396 = vmatprep.subr.mxu0 0.0
        %397 = vmatpush1.msra.mxu0 0.0
        %398 = vmatprep.subr.mxu0 0.0
        %399 = vmatpush1.msra.mxu0 0.0
        %400 = vmatprep.subr.mxu0 0.0
        %401 = vmatpush1.msra.mxu0 0.0
        %402 = vmatprep.subr.mxu0 0.0
        %403 = vmatpush1.msra.mxu0 0.0
        %404 = vmatprep.subr.mxu0 0.0
        %405 = vmatpush1.msra.mxu0 0.0
        %406 = vmatprep.mubr.f32.mxu0 0.0
        %407 = vmatmul.mubr.f32.gmra.mrb[0].mxu0 %v318
        %v408 = vpop.f32.mrb[0].mxu0
        %v409 = vadd.f32 %v340, %v408
        %v410 = vpop.f32.mrb[0].mxu0
        %411 = vdwg.mxu0
        %v412 = vmax.f32 %v409, 0.0
        %v413 = vld [vmem:[#allocation4] sm:$0xff]
        %v414 = vld [vmem:[#allocation4 + $0x8] sm:$0xff]
        %v415 = vld [vmem:[#allocation4 + $0x10] sm:$0xff]
        %v416 = vld [vmem:[#allocation4 + $0x18] sm:$0xff]
        %v417 = vld [vmem:[#allocation4 + $0x20] sm:$0xff]
        %v418 = vld [vmem:[#allocation4 + $0x28] sm:$0xff]
        %v419 = vld [vmem:[#allocation4 + $0x30] sm:$0xff]
        %v420 = vld [vmem:[#allocation4 + $0x38] sm:$0xff]
        %v421 = vld [vmem:[#allocation4 + $0x40] sm:$0xff]
        %v422 = vld [vmem:[#allocation4 + $0x48] sm:$0xff]
        %v423 = vld [vmem:[#allocation4 + $0x50] sm:$0xff]
        %v424 = vld [vmem:[#allocation4 + $0x58] sm:$0xff]
        %v425 = vld [vmem:[#allocation4 + $0x60] sm:$0xff]
        %v426 = vld [vmem:[#allocation4 + $0x68] sm:$0xff]
        %v427 = vld [vmem:[#allocation4 + $0x70] sm:$0xff]
        %v428 = vld [vmem:[#allocation4 + $0x78] sm:$0xff]
        %v429 = vld [vmem:[%s4] sm:$0x1]
        %v431 = vlaneseq
        %v432 = vshrl.u32 %v431, 7
        %v433 = vsub.s32 0, %v432
        %v434 = vrot.slane %v429, %v433
        %436 = vmatprep.subr.mxu0 0.0
        %437 = vmatpush1.msra.mxu0 %v413
        %438 = vmatprep.subr.mxu0 0.0
        %439 = vmatpush1.msra.mxu0 %v414
        %440 = vmatprep.subr.mxu0 0.0
        %441 = vmatpush1.msra.mxu0 %v415
        %442 = vmatprep.subr.mxu0 0.0
        %443 = vmatpush1.msra.mxu0 %v416
        %444 = vmatprep.subr.mxu0 0.0
        %445 = vmatpush1.msra.mxu0 %v417
        %446 = vmatprep.subr.mxu0 0.0
        %447 = vmatpush1.msra.mxu0 %v418
        %448 = vmatprep.subr.mxu0 0.0
        %449 = vmatpush1.msra.mxu0 %v419
        %450 = vmatprep.subr.mxu0 0.0
        %451 = vmatpush1.msra.mxu0 %v420
        %452 = vmatprep.subr.mxu0 0.0
        %453 = vmatpush1.msra.mxu0 %v421
        %454 = vmatprep.subr.mxu0 0.0
        %455 = vmatpush1.msra.mxu0 %v422
        %456 = vmatprep.subr.mxu0 0.0
        %457 = vmatpush1.msra.mxu0 %v423
        %458 = vmatprep.subr.mxu0 0.0
        %459 = vmatpush1.msra.mxu0 %v424
        %460 = vmatprep.subr.mxu0 0.0
        %461 = vmatpush1.msra.mxu0 %v425
        %462 = vmatprep.subr.mxu0 0.0
        %463 = vmatpush1.msra.mxu0 %v426
        %464 = vmatprep.subr.mxu0 0.0
        %465 = vmatpush1.msra.mxu0 %v427
        %466 = vmatprep.subr.mxu0 0.0
        %467 = vmatpush1.msra.mxu0 %v428
        %468 = vmatprep.subr.mxu0 0.0
        %469 = vmatpush1.msra.mxu0 0.0
        %470 = vmatprep.subr.mxu0 0.0
        %471 = vmatpush1.msra.mxu0 0.0
        %472 = vmatprep.subr.mxu0 0.0
        %473 = vmatpush1.msra.mxu0 0.0
        %474 = vmatprep.subr.mxu0 0.0
        %475 = vmatpush1.msra.mxu0 0.0
        %476 = vmatprep.subr.mxu0 0.0
        %477 = vmatpush1.msra.mxu0 0.0
        %478 = vmatprep.subr.mxu0 0.0
        %479 = vmatpush1.msra.mxu0 0.0
        %480 = vmatprep.subr.mxu0 0.0
        %481 = vmatpush1.msra.mxu0 0.0
        %482 = vmatprep.subr.mxu0 0.0
        %483 = vmatpush1.msra.mxu0 0.0
        %484 = vmatprep.subr.mxu0 0.0
        %485 = vmatpush1.msra.mxu0 0.0
        %486 = vmatprep.subr.mxu0 0.0
        %487 = vmatpush1.msra.mxu0 0.0
        %488 = vmatprep.subr.mxu0 0.0
        %489 = vmatpush1.msra.mxu0 0.0
        %490 = vmatprep.subr.mxu0 0.0
        %491 = vmatpush1.msra.mxu0 0.0
        %492 = vmatprep.subr.mxu0 0.0
        %493 = vmatpush1.msra.mxu0 0.0
        %494 = vmatprep.subr.mxu0 0.0
        %495 = vmatpush1.msra.mxu0 0.0
        %496 = vmatprep.subr.mxu0 0.0
        %497 = vmatpush1.msra.mxu0 0.0
        %498 = vmatprep.subr.mxu0 0.0
        %499 = vmatpush1.msra.mxu0 0.0
        %500 = vmatprep.mubr.f32.mxu0 0.0
        %501 = vmatmul.mubr.f32.gmra.mrb[0].mxu0 %v412
        %v502 = vpop.f32.mrb[0].mxu0
        %v503 = vadd.f32 %v434, %v502
        %v504 = vpop.f32.mrb[0].mxu0
        %505 = vdwg.mxu0
        %v506 = vmax.f32 %v503, 0.0
        %v507 = vld [vmem:[#allocation6] sm:$0xff]
        %v508 = vld [vmem:[#allocation6 + $0x8] sm:$0xff]
        %v509 = vld [vmem:[#allocation6 + $0x10] sm:$0xff]
        %v510 = vld [vmem:[#allocation6 + $0x18] sm:$0xff]
        %v511 = vld [vmem:[#allocation6 + $0x20] sm:$0xff]
        %v512 = vld [vmem:[#allocation6 + $0x28] sm:$0xff]
        %v513 = vld [vmem:[#allocation6 + $0x30] sm:$0xff]
        %v514 = vld [vmem:[#allocation6 + $0x38] sm:$0xff]
        %v515 = vld [vmem:[#allocation6 + $0x40] sm:$0xff]
        %v516 = vld [vmem:[#allocation6 + $0x48] sm:$0xff]
        %v517 = vld [vmem:[#allocation6 + $0x50] sm:$0xff]
        %v518 = vld [vmem:[#allocation6 + $0x58] sm:$0xff]
        %v519 = vld [vmem:[#allocation6 + $0x60] sm:$0xff]
        %v520 = vld [vmem:[#allocation6 + $0x68] sm:$0xff]
        %v521 = vld [vmem:[#allocation6 + $0x70] sm:$0xff]
        %v522 = vld [vmem:[#allocation6 + $0x78] sm:$0xff]
        %v523 = vld [vmem:[%s6] sm:$0x1]
        %v525 = vlaneseq
        %v526 = vshrl.u32 %v525, 7
        %v527 = vsub.s32 0, %v526
        %v528 = vrot.slane %v523, %v527
        %530 = vmatprep.subr.mxu0 0.0
        %531 = vmatpush1.msra.mxu0 %v507
        %532 = vmatprep.subr.mxu0 0.0
        %533 = vmatpush1.msra.mxu0 %v508
        %534 = vmatprep.subr.mxu0 0.0
        %535 = vmatpush1.msra.mxu0 %v509
        %536 = vmatprep.subr.mxu0 0.0
        %537 = vmatpush1.msra.mxu0 %v510
        %538 = vmatprep.subr.mxu0 0.0
        %539 = vmatpush1.msra.mxu0 %v511
        %540 = vmatprep.subr.mxu0 0.0
        %541 = vmatpush1.msra.mxu0 %v512
        %542 = vmatprep.subr.mxu0 0.0
        %543 = vmatpush1.msra.mxu0 %v513
        %544 = vmatprep.subr.mxu0 0.0
        %545 = vmatpush1.msra.mxu0 %v514
        %546 = vmatprep.subr.mxu0 0.0
        %547 = vmatpush1.msra.mxu0 %v515
        %548 = vmatprep.subr.mxu0 0.0
        %549 = vmatpush1.msra.mxu0 %v516
        %550 = vmatprep.subr.mxu0 0.0
        %551 = vmatpush1.msra.mxu0 %v517
        %552 = vmatprep.subr.mxu0 0.0
        %553 = vmatpush1.msra.mxu0 %v518
        %554 = vmatprep.subr.mxu0 0.0
        %555 = vmatpush1.msra.mxu0 %v519
        %556 = vmatprep.subr.mxu0 0.0
        %557 = vmatpush1.msra.mxu0 %v520
        %558 = vmatprep.subr.mxu0 0.0
        %559 = vmatpush1.msra.mxu0 %v521
        %560 = vmatprep.subr.mxu0 0.0
        %561 = vmatpush1.msra.mxu0 %v522
        %562 = vmatprep.subr.mxu0 0.0
        %563 = vmatpush1.msra.mxu0 0.0
        %564 = vmatprep.subr.mxu0 0.0
        %565 = vmatpush1.msra.mxu0 0.0
        %566 = vmatprep.subr.mxu0 0.0
        %567 = vmatpush1.msra.mxu0 0.0
        %568 = vmatprep.subr.mxu0 0.0
        %569 = vmatpush1.msra.mxu0 0.0
        %570 = vmatprep.subr.mxu0 0.0
        %571 = vmatpush1.msra.mxu0 0.0
        %572 = vmatprep.subr.mxu0 0.0
        %573 = vmatpush1.msra.mxu0 0.0
        %574 = vmatprep.subr.mxu0 0.0
        %575 = vmatpush1.msra.mxu0 0.0
        %576 = vmatprep.subr.mxu0 0.0
        %577 = vmatpush1.msra.mxu0 0.0
        %578 = vmatprep.subr.mxu0 0.0
        %579 = vmatpush1.msra.mxu0 0.0
        %580 = vmatprep.subr.mxu0 0.0
        %581 = vmatpush1.msra.mxu0 0.0
        %582 = vmatprep.subr.mxu0 0.0
        %583 = vmatpush1.msra.mxu0 0.0
        %584 = vmatprep.subr.mxu0 0.0
        %585 = vmatpush1.msra.mxu0 0.0
        %586 = vmatprep.subr.mxu0 0.0
        %587 = vmatpush1.msra.mxu0 0.0
        %588 = vmatprep.subr.mxu0 0.0
        %589 = vmatpush1.msra.mxu0 0.0
        %590 = vmatprep.subr.mxu0 0.0
        %591 = vmatpush1.msra.mxu0 0.0
        %592 = vmatprep.subr.mxu0 0.0
        %593 = vmatpush1.msra.mxu0 0.0
        %594 = vmatprep.mubr.f32.mxu0 0.0
        %595 = vmatmul.mubr.f32.gmra.mrb[0].mxu0 %v506
        %v596 = vpop.f32.mrb[0].mxu0
        %v597 = vadd.f32 %v528, %v596
        %v598 = vpop.f32.mrb[0].mxu0
        %599 = vdwg.mxu0
        %600 = vst [vmem:[%s317] sm:$0xff] %v597
        %p601 = scmp.lt.s32.totalorder %s20, 1
        %s602 = scalar_select %p601, %s20, 1
        %s603 = smul.addr %s602, 8
        %s604 = scalar_lea.vmem %s7, %s603
        // Predicated region
        $region61: #{_fcnet_forward_impl.1} parent=47 // pred_check
          %p605 = pneg %p190
        $region62: #{_fcnet_forward_impl.1} parent=47 // pred_check_branch
          %607 = sbr.rel (%p605) target = $region64
        $region63: #{_fcnet_forward_impl.1} parent=47 // pred_region
          _
        $region64: #{_fcnet_forward_impl.1} parent=47 // pred_fallthru
          _
      $region48: #{_fcnet_forward_impl.1} parent=5 // pred_fallthru
        _
      %p608 = scmp.le.s32.totalorder 2, %s15
      // Predicated region
      $region65: #{_fcnet_forward_impl.1} parent=5 // pred_check
        %p609 = pneg %p608
      $region66: #{_fcnet_forward_impl.1} parent=5 // pred_check_branch
        %611 = sbr.rel (%p609) target = $region68
      $region67: #{_fcnet_forward_impl.1} parent=5 // pred_region
        %s612 = ssub.s32 %s15, 2
        // Predicated region
        $region69: #{_fcnet_forward_impl.1} parent=67 // pred_check
          %p613 = pneg %p196
        $region70: #{_fcnet_forward_impl.1} parent=67 // pred_check_branch
          %615 = sbr.rel (%p613) target = $region72
        $region71: #{_fcnet_forward_impl.1} parent=67 // pred_region
          %p616 = scmp.lt.s32.totalorder %s21, 1
          %s617 = scalar_select %p616, %s21, 1
          %s618 = smul.addr %s617, 8
          %s619 = scalar_lea.vmem %s7, %s618
        $region72: #{_fcnet_forward_impl.1} parent=67 // pred_fallthru
          _
      $region68: #{_fcnet_forward_impl.1} parent=5 // pred_fallthru
        _
    $region6: #{_fcnet_forward_impl.1} parent=1 // loop_footer
      %s19 = sadd.s32 1, %s15
    $region7: #{_fcnet_forward_impl.1} parent=1 // loop_footer_branch
      %14 = sbr.rel target = $region3
    $region8: #{_fcnet_forward_impl.1} parent=1 // loop_exit
      _
    %620 = vsyncpa [#allocation3], 1
    %s621 = scalar_lea.sflag [#allocation3], 1
    %622 = vsyncpa %s621, 1
    %623 = vsyncpa [#allocation5], 1

</llo_original>
